<compile_context>
chip_gen: v5e
topology: v5e:2x2
jax: 0.10.0
libtpu: 0.0.40
codegen_flags: <defaults>
</compile_context>

<pallas_src>
import jax
import jax.numpy as jnp
from jax.experimental import pallas as pl
from jax.experimental.pallas import tpu as pltpu


def _round_up(x, m):
    return ((x + m - 1) // m) * m


def _pad2(x, rows, cols):
    r, c = x.shape
    if r == rows and c == cols:
        return x
    return jnp.pad(x, ((0, rows - r), (0, cols - c)))


def _tensorcores_per_device():
    """2 on chips with two TensorCores per device (v7x / v4 / v5p), else 1."""
    try:
        kind = jax.devices()[0].device_kind.lower()
    except Exception:
        return 1
    if "v7" in kind or "v5p" in kind or ("v4" in kind and "lite" not in kind):
        return 2
    return 1


def _vmem_physical_bytes():
    try:
        kind = jax.devices()[0].device_kind.lower()
    except Exception:
        return 64 << 20
    return (64 << 20) if "v7" in kind else (128 << 20)


# ---------------------------------------------------------------------------
# Kernel 1: item-side linear   h = item @ W_item^T + b_item   (bf16 output)
# ---------------------------------------------------------------------------
def _item_linear_kernel(item_ref, wit_ref, bi_ref, h_ref):
    h_ref[...] = (
        jnp.dot(item_ref[...], wit_ref[...], preferred_element_type=jnp.float32)
        + bi_ref[...]
    ).astype(h_ref.dtype)


# ---------------------------------------------------------------------------
# Kernel 2: aggregation   out = relu(adj @ h + user @ W_user^T + b_user)
# grid = (user tiles [parallel], item tiles [arbitrary / reduction]).
# The f32 output block is resident across k and is used as the accumulator.
# ---------------------------------------------------------------------------
def _agg_kernel(user_ref, wut_ref, bu_ref, adj_ref, h_ref, o_ref):
    k = pl.program_id(1)

    @pl.when(k == 0)
    def _():
        o_ref[...] = (
            jnp.dot(user_ref[...], wut_ref[...], preferred_element_type=jnp.float32)
            + bu_ref[...]
        )

    o_ref[...] += jnp.dot(adj_ref[...], h_ref[...],
                          preferred_element_type=jnp.float32)

    @pl.when(k == pl.num_programs(1) - 1)
    def _():
        o_ref[...] = jnp.maximum(o_ref[...], 0.0)


# ---------------------------------------------------------------------------
# Kernel 3: fully fused variant, used only when the user axis fits in ONE tile
# (then the item-side linear runs exactly once per item tile — no recompute,
# and no HBM round trip of h).
# ---------------------------------------------------------------------------
def _fused_kernel(user_ref, wut_ref, bu_ref, adj_ref,
                  item_ref, wit_ref, bi_ref, o_ref):
    k = pl.program_id(1)

    @pl.when(k == 0)
    def _():
        o_ref[...] = (
            jnp.dot(user_ref[...], wut_ref[...], preferred_element_type=jnp.float32)
            + bu_ref[...]
        )

    h = (
        jnp.dot(item_ref[...], wit_ref[...], preferred_element_type=jnp.float32)
        + bi_ref[...]
    )
    o_ref[...] += jnp.dot(adj_ref[...], h.astype(jnp.bfloat16),
                          preferred_element_type=jnp.float32)

    @pl.when(k == pl.num_programs(1) - 1)
    def _():
        o_ref[...] = jnp.maximum(o_ref[...], 0.0)


def one_side_weighted_rgcn(user_feat, item_feat, adj,
                           w_item, b_item, w_user, b_user,
                           *, tile_u=None, tile_i=None):
    """Forward pass. w_* are PyTorch-convention (out_dim, in_dim) matrices."""
    n_user, H = user_feat.shape
    n_item = item_feat.shape[0]

    Hp = _round_up(H, 128)                       # lane-aligned hidden dim

    # --- generation-aware tile selection -------------------------------------
    n_cores = _tensorcores_per_device()
    if tile_u is None:
        if n_cores >= 2 and n_user >= 256:
            # split the user axis so both TensorCores get work; keep >=128-row
            # tiles per core so per-step / MXU overhead amortizes.
            tile_u = 256 if n_user >= 1024 else 128
        else:
            # single-TC chips (v5e / v6e): one large user tile -> fewer grid
            # steps and (in the fused path) zero redundant item-linear work.
            tile_u = min(512, _round_up(n_user, 8))
    if tile_i is None:
        tile_i = min(512, _round_up(n_item, 128))

    n_user_p = _round_up(n_user, tile_u)
    n_item_p = _round_up(n_item, tile_i)
    n_u = n_user_p // tile_u
    n_k = n_item_p // tile_i

    # --- pad to tile-aligned shapes; bf16 operands (f32 accumulation) ---------
    user_p = _pad2(user_feat, n_user_p, Hp).astype(jnp.bfloat16)
    item_p = _pad2(item_feat, n_item_p, Hp).astype(jnp.bfloat16)
    # adj in bf16: exact for 0/1 masks, ~3 significant digits for real weights.
    adj_p = _pad2(adj, n_user_p, n_item_p).astype(jnp.bfloat16)
    w_user_t = _pad2(w_user.T, Hp, Hp).astype(jnp.bfloat16)
    w_item_t = _pad2(w_item.T, Hp, Hp).astype(jnp.bfloat16)
    b_user_r = _pad2(b_user.reshape(1, -1).astype(jnp.float32), 1, Hp)
    b_item_r = _pad2(b_item.reshape(1, -1).astype(jnp.float32), 1, Hp)

    # Deeper buffering only for the (small) adj stream, only when the item
    # reduction is long enough for DMA latency to be exposed.
    adj_bufs = 3 if n_k >= 4 else 2
    adj_pipe = {"pipeline_mode": pl.Buffered(adj_bufs)} if adj_bufs != 2 else {}

    vmem_phys = _vmem_physical_bytes()

    def _vmem_limit(byte_terms):
        need = int(sum(byte_terms))
        return int(min(max(int(need * 1.5) + (2 << 20), 16 << 20), vmem_phys))

    # NOTE: for Hp >~ 2048 the resident (Hp, Hp) bf16 weight blocks should be
    # K-tiled as well (extra reduction grid axis) to stay inside v7x VMEM.

    if n_u == 1:
        # ---- fully fused path (single user tile) -----------------------------
        vmem_limit = _vmem_limit([
            2 * tile_u * Hp * 2,                 # user (bf16, 2 buffers)
            2 * Hp * Hp * 2,                     # W_user^T (bf16)
            2 * Hp * 4,                          # b_user (f32)
            adj_bufs * tile_u * tile_i * 2,      # adj (bf16)
            2 * tile_i * Hp * 2,                 # item (bf16)
            2 * Hp * Hp * 2,                     # W_item^T (bf16)
            2 * Hp * 4,                          # b_item (f32)
            2 * tile_u * Hp * 4,                 # output / accumulator (f32)
        ])
        out_p = pl.pallas_call(
            _fused_kernel,
            out_shape=jax.ShapeDtypeStruct((n_user_p, Hp), jnp.float32),
            grid_spec=pltpu.PrefetchScalarGridSpec(
                num_scalar_prefetch=0,
                grid=(n_u, n_k),
                in_specs=[
                    pl.BlockSpec((tile_u, Hp), lambda i, k: (i, 0)),      # user
                    pl.BlockSpec((Hp, Hp), lambda i, k: (0, 0)),          # W_user^T
                    pl.BlockSpec((1, Hp), lambda i, k: (0, 0)),           # b_user
                    pl.BlockSpec((tile_u, tile_i), lambda i, k: (i, k),
                                 **adj_pipe),                             # adj
                    pl.BlockSpec((tile_i, Hp), lambda i, k: (k, 0)),      # item
                    pl.BlockSpec((Hp, Hp), lambda i, k: (0, 0)),          # W_item^T
                    pl.BlockSpec((1, Hp), lambda i, k: (0, 0)),           # b_item
                ],
                out_specs=pl.BlockSpec((tile_u, Hp), lambda i, k: (i, 0)),
            ),
            compiler_params=pltpu.CompilerParams(
                dimension_semantics=("parallel", "arbitrary"),
                vmem_limit_bytes=vmem_limit,
            ),
        )(user_p, w_user_t, b_user_r, adj_p, item_p, w_item_t, b_item_r)
    else:
        # ---- two-pass path: precompute h once, then stream it ----------------
        vmem_limit_h = _vmem_limit([
            2 * tile_i * Hp * 2,                 # item in
            2 * Hp * Hp * 2,                     # W_item^T
            2 * Hp * 4,                          # b_item
            2 * tile_i * Hp * 2,                 # h out (bf16)
        ])
        h_p = pl.pallas_call(
            _item_linear_kernel,
            out_shape=jax.ShapeDtypeStruct((n_item_p, Hp), jnp.bfloat16),
            grid_spec=pltpu.PrefetchScalarGridSpec(
                num_scalar_prefetch=0,
                grid=(n_k,),
                in_specs=[
                    pl.BlockSpec((tile_i, Hp), lambda k: (k, 0)),
                    pl.BlockSpec((Hp, Hp), lambda k: (0, 0)),
                    pl.BlockSpec((1, Hp), lambda k: (0, 0)),
                ],
                out_specs=pl.BlockSpec((tile_i, Hp), lambda k: (k, 0)),
            ),
            compiler_params=pltpu.CompilerParams(
                dimension_semantics=("parallel",),
                vmem_limit_bytes=vmem_limit_h,
            ),
        )(item_p, w_item_t, b_item_r)

        vmem_limit = _vmem_limit([
            2 * tile_u * Hp * 2,                 # user
            2 * Hp * Hp * 2,                     # W_user^T
            2 * Hp * 4,                          # b_user
            adj_bufs * tile_u * tile_i * 2,      # adj
            2 * tile_i * Hp * 2,                 # h (bf16)
            2 * tile_u * Hp * 4,                 # output / accumulator (f32)
        ])
        out_p = pl.pallas_call(
            _agg_kernel,
            out_shape=jax.ShapeDtypeStruct((n_user_p, Hp), jnp.float32),
            grid_spec=pltpu.PrefetchScalarGridSpec(
                num_scalar_prefetch=0,
                grid=(n_u, n_k),
                in_specs=[
                    pl.BlockSpec((tile_u, Hp), lambda i, k: (i, 0)),      # user
                    pl.BlockSpec((Hp, Hp), lambda i, k: (0, 0)),          # W_user^T
                    pl.BlockSpec((1, Hp), lambda i, k: (0, 0)),           # b_user
                    pl.BlockSpec((tile_u, tile_i), lambda i, k: (i, k),
                                 **adj_pipe),                             # adj
                    pl.BlockSpec((tile_i, Hp), lambda i, k: (k, 0)),      # h
                ],
                out_specs=pl.BlockSpec((tile_u, Hp), lambda i, k: (i, 0)),
            ),
            compiler_params=pltpu.CompilerParams(
                dimension_semantics=("parallel", "arbitrary"),
                vmem_limit_bytes=vmem_limit,
            ),
        )(user_p, w_user_t, b_user_r, adj_p, h_p)

    out = out_p[:n_user, :H]
    if user_feat.dtype != jnp.float32:
        out = out.astype(user_feat.dtype)
    return out


# ---------------------------------------------------------------------------
# Pure-JAX reference (mirrors the PyTorch module, f32 throughout)
# ---------------------------------------------------------------------------
def _ref(user_feat, item_feat, adj, w_item, b_item, w_user, b_user):
    h = item_feat @ w_item.T + b_item
    b = user_feat @ w_user.T + b_user
    return jax.nn.relu(adj @ h + b)


def _make_inputs(key, n_user, n_item, H, density=0.1):
    k1, k2, k3, k4, k5, k6, k7 = jax.random.split(key, 7)
    user_feat = jax.random.normal(k1, (n_user, H), jnp.float32)
    item_feat = jax.random.normal(k2, (n_item, H), jnp.float32)
    # synthetic sparse-ish adjacency, materialized dense (adj.to_dense())
    adj = (jax.random.uniform(k3, (n_user, n_item)) < density).astype(jnp.float32)
    scale = 1.0 / jnp.sqrt(H)
    w_item = jax.random.uniform(k4, (H, H), jnp.float32, -scale, scale)
    b_item = jax.random.uniform(k5, (H,), jnp.float32, -scale, scale)
    w_user = jax.random.uniform(k6, (H, H), jnp.float32, -scale, scale)
    b_user = jax.random.uniform(k7, (H,), jnp.float32, -scale, scale)
    return user_feat, item_feat, adj, w_item, b_item, w_user, b_user


if __name__ == "__main__":
    key = jax.random.PRNGKey(0)
    k_a, k_b = jax.random.split(key)

    # Tolerances account for bf16 operands (f32 accumulation) on both linears,
    # the adj @ h aggregation, and the bf16 h stream.
    ATOL, RTOL = 1.5e-1, 5e-2

    # Case 1: hidden_dim=128, 128 users, 256 items -> single user tile,
    # exercises the fully fused kernel with a 2-step item reduction.
    args1 = _make_inputs(k_a, 128, 256, 128)
    out1 = jax.block_until_ready(one_side_weighted_rgcn(*args1, tile_i=128))
    exp1 = _ref(*args1)
    assert out1.shape == exp1.shape
    err1 = float(jnp.max(jnp.abs(out1 - exp1)))
    assert jnp.allclose(out1, exp1, atol=ATOL, rtol=RTOL), err1

    # Case 2: non-aligned shapes (H=96, 192 users, 320 items) with tile_u=64
    # -> 3 user tiles, exercises the precomputed-h two-pass path + padding.
    args2 = _make_inputs(k_b, 192, 320, 96)
    out2 = jax.block_until_ready(
        one_side_weighted_rgcn(*args2, tile_u=64, tile_i=128))
    exp2 = _ref(*args2)
    assert out2.shape == exp2.shape
    err2 = float(jnp.max(jnp.abs(out2 - exp2)))
    assert jnp.allclose(out2, exp2, atol=ATOL, rtol=RTOL), err2

    print("KERNEL_OK")
</pallas_src>

<mosaic_0001>
module attributes {stable_mosaic.version = 11 : i64} {
  func.func @_fused_kernel(%arg0: i32, %arg1: i32, %arg2: memref<128x128xbf16, #tpu.memory_space<vmem>>, %arg3: memref<128x128xbf16, #tpu.memory_space<vmem>>, %arg4: memref<1x128xf32, #tpu.memory_space<vmem>>, %arg5: memref<128x128xbf16, #tpu.memory_space<vmem>>, %arg6: memref<128x128xbf16, #tpu.memory_space<vmem>>, %arg7: memref<128x128xbf16, #tpu.memory_space<vmem>>, %arg8: memref<1x128xf32, #tpu.memory_space<vmem>>, %arg9: memref<128x128xf32, #tpu.memory_space<vmem>>) attributes {dimension_semantics = [#tpu.dimension_semantics<parallel>, #tpu.dimension_semantics<arbitrary>], iteration_bounds = array<i64: 1, 2>, scalar_prefetch = 0 : i64, scratch_operands = 0 : i64, tpu.core_type = #tpu.core_type<tc>, window_params = [{transform_indices = @transform_0, window_bounds = array<i64: 128, 128>}, {pipeline_mode = #tpu.pipeline_mode<synchronous>, transform_indices = @transform_1, window_bounds = array<i64: 128, 128>}, {pipeline_mode = #tpu.pipeline_mode<synchronous>, transform_indices = @transform_2, window_bounds = array<i64: 1, 128>}, {transform_indices = @transform_3, window_bounds = array<i64: 128, 128>}, {transform_indices = @transform_4, window_bounds = array<i64: 128, 128>}, {pipeline_mode = #tpu.pipeline_mode<synchronous>, transform_indices = @transform_5, window_bounds = array<i64: 128, 128>}, {pipeline_mode = #tpu.pipeline_mode<synchronous>, transform_indices = @transform_6, window_bounds = array<i64: 1, 128>}, {transform_indices = @transform_7, window_bounds = array<i64: 128, 128>}]} {
    %c0_i32 = arith.constant 0 : i32
    %0 = arith.cmpi eq, %arg1, %c0_i32 : i32
    %1 = arith.extui %0 : i1 to i32
    %c0_i32_0 = arith.constant 0 : i32
    %2 = arith.cmpi ne, %1, %c0_i32_0 : i32
    scf.if %2 {
      %c0_14 = arith.constant 0 : index
      %c0_15 = arith.constant 0 : index
      %18 = vector.load %arg2[%c0_14, %c0_15] : memref<128x128xbf16, #tpu.memory_space<vmem>>, vector<128x128xbf16>
      %c0_16 = arith.constant 0 : index
      %c0_17 = arith.constant 0 : index
      %19 = vector.load %arg3[%c0_16, %c0_17] : memref<128x128xbf16, #tpu.memory_space<vmem>>, vector<128x128xbf16>
      %cst_18 = arith.constant dense<0.000000e+00> : vector<128x128xf32>
      %20 = tpu.matmul %18, %19, %cst_18 {dimension_numbers = #tpu.dot_dimension_numbers<[1], [0], [0], [1], [0, 0, 1, 1], [], []>} : vector<128x128xbf16>, vector<128x128xbf16>, vector<128x128xf32> -> vector<128x128xf32>
      %c0_19 = arith.constant 0 : index
      %c0_20 = arith.constant 0 : index
      %21 = vector.load %arg4[%c0_19, %c0_20] : memref<1x128xf32, #tpu.memory_space<vmem>>, vector<1x128xf32>
      %22 = vector.broadcast %21 : vector<1x128xf32> to vector<128x128xf32>
      %23 = arith.addf %20, %22 : vector<128x128xf32>
      %c0_21 = arith.constant 0 : index
      %c0_22 = arith.constant 0 : index
      %24 = vector.load %arg9[%c0_21, %c0_22] : memref<128x128xf32, #tpu.memory_space<vmem>>, vector<128x128xf32>
      tpu.vector_store %arg9[%c0_21, %c0_22], %23 {strides = array<i32>} : memref<128x128xf32, #tpu.memory_space<vmem>>, vector<128x128xf32>,
    } else {
    }
    %c0 = arith.constant 0 : index
    %c0_1 = arith.constant 0 : index
    %3 = vector.load %arg6[%c0, %c0_1] : memref<128x128xbf16, #tpu.memory_space<vmem>>, vector<128x128xbf16>
    %c0_2 = arith.constant 0 : index
    %c0_3 = arith.constant 0 : index
    %4 = vector.load %arg7[%c0_2, %c0_3] : memref<128x128xbf16, #tpu.memory_space<vmem>>, vector<128x128xbf16>
    %cst = arith.constant dense<0.000000e+00> : vector<128x128xf32>
    %5 = tpu.matmul %3, %4, %cst {dimension_numbers = #tpu.dot_dimension_numbers<[1], [0], [0], [1], [0, 0, 1, 1], [], []>} : vector<128x128xbf16>, vector<128x128xbf16>, vector<128x128xf32> -> vector<128x128xf32>
    %c0_4 = arith.constant 0 : index
    %c0_5 = arith.constant 0 : index
    %6 = vector.load %arg8[%c0_4, %c0_5] : memref<1x128xf32, #tpu.memory_space<vmem>>, vector<1x128xf32>
    %7 = vector.broadcast %6 : vector<1x128xf32> to vector<128x128xf32>
    %8 = arith.addf %5, %7 : vector<128x128xf32>
    %c0_6 = arith.constant 0 : index
    %c0_7 = arith.constant 0 : index
    %9 = vector.load %arg9[%c0_6, %c0_7] : memref<128x128xf32, #tpu.memory_space<vmem>>, vector<128x128xf32>
    %c0_8 = arith.constant 0 : index
    %c0_9 = arith.constant 0 : index
    %10 = vector.load %arg5[%c0_8, %c0_9] : memref<128x128xbf16, #tpu.memory_space<vmem>>, vector<128x128xbf16>
    %11 = arith.truncf %8 : vector<128x128xf32> to vector<128x128xbf16>
    %cst_10 = arith.constant dense<0.000000e+00> : vector<128x128xf32>
    %12 = tpu.matmul %10, %11, %cst_10 {dimension_numbers = #tpu.dot_dimension_numbers<[1], [0], [0], [1], [0, 0, 1, 1], [], []>} : vector<128x128xbf16>, vector<128x128xbf16>, vector<128x128xf32> -> vector<128x128xf32>
    %13 = arith.addf %9, %12 : vector<128x128xf32>
    %c0_11 = arith.constant 0 : index
    %c0_12 = arith.constant 0 : index
    %14 = vector.load %arg9[%c0_11, %c0_12] : memref<128x128xf32, #tpu.memory_space<vmem>>, vector<128x128xf32>
    tpu.vector_store %arg9[%c0_11, %c0_12], %13 {strides = array<i32>} : memref<128x128xf32, #tpu.memory_space<vmem>>, vector<128x128xf32>,
    %c1_i32 = arith.constant 1 : i32
    %15 = arith.cmpi eq, %arg1, %c1_i32 : i32
    %16 = arith.extui %15 : i1 to i32
    %c0_i32_13 = arith.constant 0 : i32
    %17 = arith.cmpi ne, %16, %c0_i32_13 : i32
    scf.if %17 {
      %c0_14 = arith.constant 0 : index
      %c0_15 = arith.constant 0 : index
      %18 = vector.load %arg9[%c0_14, %c0_15] : memref<128x128xf32, #tpu.memory_space<vmem>>, vector<128x128xf32>
      %cst_16 = arith.constant 0.000000e+00 : f32
      %19 = vector.broadcast %cst_16 : f32 to vector<128x128xf32>
      %20 = arith.maximumf %18, %19 : vector<128x128xf32>
      %c0_17 = arith.constant 0 : index
      %c0_18 = arith.constant 0 : index
      %21 = vector.load %arg9[%c0_17, %c0_18] : memref<128x128xf32, #tpu.memory_space<vmem>>, vector<128x128xf32>
      tpu.vector_store %arg9[%c0_17, %c0_18], %20 {strides = array<i32>} : memref<128x128xf32, #tpu.memory_space<vmem>>, vector<128x128xf32>,
    } else {
    }
    return
  }
  func.func @transform_0(%arg0: i32, %arg1: i32) -> (i32, i32) {
    %c0_i32 = arith.constant 0 : i32
    %c0_i32_0 = arith.constant 0 : i32
    return %arg0, %c0_i32 : i32, i32
  }
  func.func @transform_1(%arg0: i32, %arg1: i32) -> (i32, i32) {
    %c0_i32 = arith.constant 0 : i32
    %c0_i32_0 = arith.constant 0 : i32
    %c0_i32_1 = arith.constant 0 : i32
    return %c0_i32, %c0_i32_0 : i32, i32
  }
  func.func @transform_2(%arg0: i32, %arg1: i32) -> (i32, i32) {
    %c0_i32 = arith.constant 0 : i32
    %c0_i32_0 = arith.constant 0 : i32
    %c0_i32_1 = arith.constant 0 : i32
    return %c0_i32, %c0_i32_0 : i32, i32
  }
  func.func @transform_3(%arg0: i32, %arg1: i32) -> (i32, i32) {
    %c0_i32 = arith.constant 0 : i32
    return %arg0, %arg1 : i32, i32
  }
  func.func @transform_4(%arg0: i32, %arg1: i32) -> (i32, i32) {
    %c0_i32 = arith.constant 0 : i32
    %c0_i32_0 = arith.constant 0 : i32
    return %arg1, %c0_i32 : i32, i32
  }
  func.func @transform_5(%arg0: i32, %arg1: i32) -> (i32, i32) {
    %c0_i32 = arith.constant 0 : i32
    %c0_i32_0 = arith.constant 0 : i32
    %c0_i32_1 = arith.constant 0 : i32
    return %c0_i32, %c0_i32_0 : i32, i32
  }
  func.func @transform_6(%arg0: i32, %arg1: i32) -> (i32, i32) {
    %c0_i32 = arith.constant 0 : i32
    %c0_i32_0 = arith.constant 0 : i32
    %c0_i32_1 = arith.constant 0 : i32
    return %c0_i32, %c0_i32_0 : i32, i32
  }
  func.func @transform_7(%arg0: i32, %arg1: i32) -> (i32, i32) {
    %c0_i32 = arith.constant 0 : i32
    %c0_i32_0 = arith.constant 0 : i32
    return %arg0, %c0_i32 : i32, i32
  }
}

</mosaic_0001>

<llo_original>
// kernel: tpu_custom_call.1
$region0: #{tpu_custom_call.1}
  #allocation0 [shape = 'u32[]', space=smem, size = 0x4, offset = 0x4, fixed_abs, tag = 'smem constant byte address 0x4 - core index']
  #allocation1 [shape = 'u32[72,128]{1,0:T(1,128)}', space=vmem, size = 0x9000, scoped, tag = 'internal scratch']
  %s0 = inlined_call_operand.hbm [shape: bf16[128,128], index: 0, kind: input, shape index: {}]
  %s1 = inlined_call_operand.hbm [shape: bf16[128,128], index: 1, kind: input, shape index: {}]
  %s2 = inlined_call_operand.vmem [shape: f32[1,128], index: 2, kind: input, shape index: {}]
  %s3 = inlined_call_operand.hbm [shape: bf16[128,256], index: 3, kind: input, shape index: {}]
  %s4 = inlined_call_operand.hbm [shape: bf16[256,128], index: 4, kind: input, shape index: {}]
  %s5 = inlined_call_operand.hbm [shape: bf16[128,128], index: 5, kind: input, shape index: {}]
  %s6 = inlined_call_operand.vmem [shape: f32[1,128], index: 6, kind: input, shape index: {}]
  %s7 = inlined_call_operand.hbm [shape: f32[128,128], index: 7, kind: output, shape index: {}]
  %s8 = sld [smem:[#allocation0]]
  $region89: #{tpu_custom_call.1} parent=0
    _
  %s10 = ssub.s32 1, %s8
  %s11 = scalar_select 0, %s10, %s8
  $region1: #{tpu_custom_call.1} parent=0
    #allocation2 [shape = 'u8[32768]{0}', space=vmem, size = 0x8000, scoped, tag = 'input window, operand 0, single buffered']
    #allocation3 [shape = 's32[2]{0}', space=sflag, size = 0x8, scoped, tag = 'scoped memory for tpu_custom_call.1']
    #allocation4 [shape = 's32[2]{0}', space=sflag, size = 0x8, scoped, tag = 'scoped memory for tpu_custom_call.1']
    #allocation5 [shape = 'u8[32768]{0}', space=vmem, size = 0x8000, scoped, tag = 'input window, operand 1, single buffered']
    #allocation6 [shape = 's32[1]{0}', space=sflag, size = 0x4, scoped, tag = 'scoped memory for tpu_custom_call.1']
    #allocation7 [shape = 'u8[65536]{0}', space=vmem, size = 0x10000, scoped, tag = 'input window, operand 3']
    #allocation8 [shape = 'u8[65536]{0}', space=vmem, size = 0x10000, scoped, tag = 'input window, operand 4']
    #allocation9 [shape = 'u8[32768]{0}', space=vmem, size = 0x8000, scoped, tag = 'input window, operand 5, single buffered']
    #allocation10 [shape = 'u8[65536]{0}', space=vmem, size = 0x10000, scoped, tag = 'output window, operand 0, single buffered']
    %12 = vsyncpa [#allocation3], 0
    %13 = vsyncpa [#allocation6], 0
    %14 = vsyncpa [#allocation4], 0
    loop: start=0, step=1, limit=4
    $region2: #{tpu_custom_call.1} parent=1 // loop_pre_header
      _
    $region3: #{tpu_custom_call.1} parent=1 // loop_header
      %s16 = sphi 0, %s20
      %p17 = scmp.ge.s32.totalorder %s16, 4
      %s23 = sphi 0, %s35
      %s24 = sphi 0, %s31
      %s25 = sphi 0, %s23
      %s26 = sphi 0, %s24
      %s27 = sphi 0, %s25
      %s28 = sphi 0, %s26
      %s38 = sphi 0, %s40
      %s41 = sphi 0, %s38
      %s42 = sphi 0, %s41
      %s58 = sphi 0, %s42
      %s62 = sphi 0, %s62
      %s64 = sphi 0, %s62
      %s65 = sphi 0, %s64
      %s79 = sphi 0, %s65
      %s83 = sphi 0, %s83
      %s85 = sphi 0, %s83
      %s86 = sphi 0, %s85
      %s100 = sphi 0, %s86
      %s108 = sphi 0, %s110
      %s111 = sphi 0, %s108
      %s112 = sphi 0, %s111
      %s128 = sphi 0, %s112
      %s134 = sphi 0, %s136
      %s137 = sphi 0, %s134
      %s138 = sphi 0, %s137
      %s154 = sphi 0, %s138
      %s158 = sphi 0, %s158
      %s160 = sphi 0, %s158
      %s161 = sphi 0, %s160
      %s175 = sphi 0, %s161
      %s179 = sphi 0, %s179
      %s181 = sphi 0, %s179
      %s182 = sphi 0, %s181
      %s196 = sphi 0, %s182
      %s202 = sphi 0, %s204
      %s205 = sphi 0, %s202
      %s206 = sphi 0, %s205
      %s222 = sphi 0, %s206
    $region4: #{tpu_custom_call.1} parent=1 // loop_header_branch
      %19 = sbr.rel (%p17) target = $region8
    $region5: #{tpu_custom_call.1} parent=1 // loop_body
      %s21 = ssub.s32 %s16, 1
      %s22 = ssub.s32 %s16, 2
      %s29 = sadd.s32 1, %s24
      %p30 = scmp.ge.s32.totalorder %s29, 2
      %s31 = scalar_select %p30, 0, %s29
      %s32 = sadd.s32 1, %s23
      %s33 = scalar_select %p30, %s32, %s23
      %p34 = scmp.ge.s32.totalorder %s33, 1
      %s35 = scalar_select %p34, 0, %s33
      %s36 = ssub.s32 %s23, %s35
      %p37 = scmp.eq.s32.totalorder %s36, 0
      %s39 = sadd.s32 %s38, 1
      %s40 = scalar_select %p37, %s38, %s39
      %p43 = pneg %p37
      %p44 = scmp.eq.s32.totalorder %s16, 1
      %p45 = por %p43, %p44
      %p46 = scmp.ne.s32.totalorder %s38, %s41
      %p47 = scmp.eq.s32.totalorder %s16, 0
      %p48 = por %p46, %p47
      %p49 = scmp.ne.s32.totalorder %s38, %s41
      %p50 = scmp.eq.s32.totalorder %s21, 1
      %p51 = por %p49, %p50
      %p52 = scmp.ne.s32.totalorder %s41, %s42
      %p53 = scmp.eq.s32.totalorder %s21, 0
      %p54 = por %p52, %p53
      %p55 = scmp.ne.s32.totalorder %s41, %s42
      %p56 = scmp.eq.s32.totalorder %s22, 1
      %p57 = por %p55, %p56
      %p59 = scmp.ne.s32.totalorder %s42, %s58
      %p60 = scmp.eq.s32.totalorder %s22, 0
      %p61 = por %p59, %p60
      %s63 = sadd.s32 %s62, 1
      %p66 = scmp.eq.s32.totalorder %s16, 1
      %p67 = scmp.ne.s32.totalorder %s62, %s64
      %p68 = scmp.eq.s32.totalorder %s16, 0
      %p69 = por %p67, %p68
      %p70 = scmp.ne.s32.totalorder %s62, %s64
      %p71 = scmp.eq.s32.totalorder %s21, 1
      %p72 = por %p70, %p71
      %p73 = scmp.ne.s32.totalorder %s64, %s65
      %p74 = scmp.eq.s32.totalorder %s21, 0
      %p75 = por %p73, %p74
      %p76 = scmp.ne.s32.totalorder %s64, %s65
      %p77 = scmp.eq.s32.totalorder %s22, 1
      %p78 = por %p76, %p77
      %p80 = scmp.ne.s32.totalorder %s65, %s79
      %p81 = scmp.eq.s32.totalorder %s22, 0
      %p82 = por %p80, %p81
      %s84 = sadd.s32 %s83, 1
      %p87 = scmp.eq.s32.totalorder %s16, 1
      %p88 = scmp.ne.s32.totalorder %s83, %s85
      %p89 = scmp.eq.s32.totalorder %s16, 0
      %p90 = por %p88, %p89
      %p91 = scmp.ne.s32.totalorder %s83, %s85
      %p92 = scmp.eq.s32.totalorder %s21, 1
      %p93 = por %p91, %p92
      %p94 = scmp.ne.s32.totalorder %s85, %s86
      %p95 = scmp.eq.s32.totalorder %s21, 0
      %p96 = por %p94, %p95
      %p97 = scmp.ne.s32.totalorder %s85, %s86
      %p98 = scmp.eq.s32.totalorder %s22, 1
      %p99 = por %p97, %p98
      %p101 = scmp.ne.s32.totalorder %s86, %s100
      %p102 = scmp.eq.s32.totalorder %s22, 0
      %p103 = por %p101, %p102
      %s104 = ssub.s32 %s23, %s35
      %s105 = ssub.s32 %s24, %s31
      %s106 = sor.u32 %s104, %s105
      %p107 = scmp.eq.s32.totalorder %s106, 0
      %s109 = sadd.s32 %s108, 1
      %s110 = scalar_select %p107, %s108, %s109
      %p113 = pneg %p107
      %p114 = scmp.eq.s32.totalorder %s16, 1
      %p115 = por %p113, %p114
      %p116 = scmp.ne.s32.totalorder %s108, %s111
      %p117 = scmp.eq.s32.totalorder %s16, 0
      %p118 = por %p116, %p117
      %p119 = scmp.ne.s32.totalorder %s108, %s111
      %p120 = scmp.eq.s32.totalorder %s21, 1
      %p121 = por %p119, %p120
      %p122 = scmp.ne.s32.totalorder %s111, %s112
      %p123 = scmp.eq.s32.totalorder %s21, 0
      %p124 = por %p122, %p123
      %p125 = scmp.ne.s32.totalorder %s111, %s112
      %p126 = scmp.eq.s32.totalorder %s22, 1
      %p127 = por %p125, %p126
      %p129 = scmp.ne.s32.totalorder %s112, %s128
      %p130 = scmp.eq.s32.totalorder %s22, 0
      %p131 = por %p129, %p130
      %s132 = ssub.s32 %s24, %s31
      %p133 = scmp.eq.s32.totalorder %s132, 0
      %s135 = sadd.s32 %s134, 1
      %s136 = scalar_select %p133, %s134, %s135
      %p139 = pneg %p133
      %p140 = scmp.eq.s32.totalorder %s16, 1
      %p141 = por %p139, %p140
      %p142 = scmp.ne.s32.totalorder %s134, %s137
      %p143 = scmp.eq.s32.totalorder %s16, 0
      %p144 = por %p142, %p143
      %p145 = scmp.ne.s32.totalorder %s134, %s137
      %p146 = scmp.eq.s32.totalorder %s21, 1
      %p147 = por %p145, %p146
      %p148 = scmp.ne.s32.totalorder %s137, %s138
      %p149 = scmp.eq.s32.totalorder %s21, 0
      %p150 = por %p148, %p149
      %p151 = scmp.ne.s32.totalorder %s137, %s138
      %p152 = scmp.eq.s32.totalorder %s22, 1
      %p153 = por %p151, %p152
      %p155 = scmp.ne.s32.totalorder %s138, %s154
      %p156 = scmp.eq.s32.totalorder %s22, 0
      %p157 = por %p155, %p156
      %s159 = sadd.s32 %s158, 1
      %p162 = scmp.eq.s32.totalorder %s16, 1
      %p163 = scmp.ne.s32.totalorder %s158, %s160
      %p164 = scmp.eq.s32.totalorder %s16, 0
      %p165 = por %p163, %p164
      %p166 = scmp.ne.s32.totalorder %s158, %s160
      %p167 = scmp.eq.s32.totalorder %s21, 1
      %p168 = por %p166, %p167
      %p169 = scmp.ne.s32.totalorder %s160, %s161
      %p170 = scmp.eq.s32.totalorder %s21, 0
      %p171 = por %p169, %p170
      %p172 = scmp.ne.s32.totalorder %s160, %s161
      %p173 = scmp.eq.s32.totalorder %s22, 1
      %p174 = por %p172, %p173
      %p176 = scmp.ne.s32.totalorder %s161, %s175
      %p177 = scmp.eq.s32.totalorder %s22, 0
      %p178 = por %p176, %p177
      %s180 = sadd.s32 %s179, 1
      %p183 = scmp.eq.s32.totalorder %s16, 1
      %p184 = scmp.ne.s32.totalorder %s179, %s181
      %p185 = scmp.eq.s32.totalorder %s16, 0
      %p186 = por %p184, %p185
      %p187 = scmp.ne.s32.totalorder %s179, %s181
      %p188 = scmp.eq.s32.totalorder %s21, 1
      %p189 = por %p187, %p188
      %p190 = scmp.ne.s32.totalorder %s181, %s182
      %p191 = scmp.eq.s32.totalorder %s21, 0
      %p192 = por %p190, %p191
      %p193 = scmp.ne.s32.totalorder %s181, %s182
      %p194 = scmp.eq.s32.totalorder %s22, 1
      %p195 = por %p193, %p194
      %p197 = scmp.ne.s32.totalorder %s182, %s196
      %p198 = scmp.eq.s32.totalorder %s22, 0
      %p199 = por %p197, %p198
      %s200 = ssub.s32 %s23, %s35
      %p201 = scmp.eq.s32.totalorder %s200, 0
      %s203 = sadd.s32 %s202, 1
      %s204 = scalar_select %p201, %s202, %s203
      %p207 = pneg %p201
      %p208 = scmp.eq.s32.totalorder %s16, 1
      %p209 = por %p207, %p208
      %p210 = scmp.ne.s32.totalorder %s202, %s205
      %p211 = scmp.eq.s32.totalorder %s16, 0
      %p212 = por %p210, %p211
      %p213 = scmp.ne.s32.totalorder %s202, %s205
      %p214 = scmp.eq.s32.totalorder %s21, 1
      %p215 = por %p213, %p214
      %p216 = scmp.ne.s32.totalorder %s205, %s206
      %p217 = scmp.eq.s32.totalorder %s21, 0
      %p218 = por %p216, %p217
      %p219 = scmp.ne.s32.totalorder %s205, %s206
      %p220 = scmp.eq.s32.totalorder %s22, 1
      %p221 = por %p219, %p220
      %p223 = scmp.ne.s32.totalorder %s206, %s222
      %p224 = scmp.eq.s32.totalorder %s22, 0
      %p225 = por %p223, %p224
      %p226 = scmp.le.s32.totalorder 1, %s16
      %p227 = scmp.lt.s32.totalorder %s16, 3
      %p228 = pnand %p226, %p227
      %p229 = pneg %p228
      // Predicated region
      $region9: #{tpu_custom_call.1} parent=5 // pred_check
        _
      $region10: #{tpu_custom_call.1} parent=5 // pred_check_branch
        %231 = sbr.rel (%p228) target = $region12
      $region11: #{tpu_custom_call.1} parent=5 // pred_region
        %s232 = ssub.s32 %s16, 1
        // Predicated region
        $region13: #{tpu_custom_call.1} parent=11 // pred_check
          %p233 = pneg %p54
        $region14: #{tpu_custom_call.1} parent=11 // pred_check_branch
          %235 = sbr.rel (%p233) target = $region16
        $region15: #{tpu_custom_call.1} parent=11 // pred_region
          %s236 = smul.u32 16, %s25
          %238 = vsyncadd [#allocation3], 0
          %s239 = smul.addr %s236, 4
          %s240 = scalar_lea.hbm %s0, %s239
          %s241 = sshll.u32 %s240, 4
          %s242 = int_to_ptr.hbm [resolvable:$true] %s241
          %s243 = sshll.u32 [#allocation2], 4
          %s244 = int_to_ptr.vmem [resolvable:$true] %s243
          %249 = dma.hbm_to_vmem [thread:$0]  %s242, 1024, %s244, [#allocation3], 64, 64, 4
        $region16: #{tpu_custom_call.1} parent=11 // pred_fallthru
          _
        // Predicated region
        $region17: #{tpu_custom_call.1} parent=11 // pred_check
          %p250 = pneg %p75
        $region18: #{tpu_custom_call.1} parent=11 // pred_check_branch
          %252 = sbr.rel (%p250) target = $region20
        $region19: #{tpu_custom_call.1} parent=11 // pred_region
          %254 = vsyncadd [#allocation6], 0
          %s255 = sshll.u32 %s1, 4
          %s256 = int_to_ptr.hbm [resolvable:$true] %s255
          %s257 = sshll.u32 [#allocation5], 4
          %s258 = int_to_ptr.vmem [resolvable:$true] %s257
          %263 = dma.hbm_to_vmem [thread:$0]  %s256, 1024, %s258, [#allocation6], 64, 64, 4
        $region20: #{tpu_custom_call.1} parent=11 // pred_fallthru
          _
        // Predicated region
        $region21: #{tpu_custom_call.1} parent=11 // pred_check
          %p264 = pneg %p96
        $region22: #{tpu_custom_call.1} parent=11 // pred_check_branch
          %266 = sbr.rel (%p264) target = $region24
        $region23: #{tpu_custom_call.1} parent=11 // pred_region
          _
        $region24: #{tpu_custom_call.1} parent=11 // pred_fallthru
          _
        // Predicated region
        $region25: #{tpu_custom_call.1} parent=11 // pred_check
          %p267 = pneg %p171
        $region26: #{tpu_custom_call.1} parent=11 // pred_check_branch
          %269 = sbr.rel (%p267) target = $region28
        $region27: #{tpu_custom_call.1} parent=11 // pred_region
          %271 = vsyncadd [#allocation6], 0
          %s272 = sshll.u32 %s5, 4
          %s273 = int_to_ptr.hbm [resolvable:$true] %s272
          %s274 = sshll.u32 [#allocation9], 4
          %s275 = int_to_ptr.vmem [resolvable:$true] %s274
          %280 = dma.hbm_to_vmem [thread:$0]  %s273, 1024, %s275, [#allocation6], 64, 64, 4
        $region28: #{tpu_custom_call.1} parent=11 // pred_fallthru
          _
        // Predicated region
        $region29: #{tpu_custom_call.1} parent=11 // pred_check
          %p281 = pneg %p192
        $region30: #{tpu_custom_call.1} parent=11 // pred_check_branch
          %283 = sbr.rel (%p281) target = $region32
        $region31: #{tpu_custom_call.1} parent=11 // pred_region
          _
        $region32: #{tpu_custom_call.1} parent=11 // pred_fallthru
          _
      $region12: #{tpu_custom_call.1} parent=5 // pred_fallthru
        _
      %p284 = scmp.lt.s32.totalorder %s16, 2
      // Predicated region
      $region33: #{tpu_custom_call.1} parent=5 // pred_check
        %p285 = pneg %p284
      $region34: #{tpu_custom_call.1} parent=5 // pred_check_branch
        %287 = sbr.rel (%p285) target = $region36
      $region35: #{tpu_custom_call.1} parent=5 // pred_region
        // Predicated region
        $region37: #{tpu_custom_call.1} parent=35 // pred_check
          %p288 = pneg %p118
        $region38: #{tpu_custom_call.1} parent=35 // pred_check_branch
          %290 = sbr.rel (%p288) target = $region40
        $region39: #{tpu_custom_call.1} parent=35 // pred_region
          %s291 = sand.u32 %s16, 1
          %s292 = scalar_lea.sflag [#allocation3], %s291
          %s293 = sand.u32 %s108, 1
          %s294 = smul.addr %s293, 64
          %s295 = scalar_lea.vmem [#allocation7], %s294
          %s296 = smul.u32 16, %s23
          %298 = vsyncadd %s292, 0
          %s299 = smul.addr %s296, 2
          %s300 = sadd.s32 %s24, %s299
          %s301 = smul.addr %s300, 4
          %s302 = scalar_lea.hbm %s3, %s301
          %s303 = sshll.u32 %s302, 4
          %s304 = int_to_ptr.hbm [resolvable:$true] %s303
          %s305 = sshll.u32 %s295, 4
          %s306 = int_to_ptr.vmem [resolvable:$true] %s305
          %311 = dma.hbm_to_vmem [thread:$0]  %s304, 1024, %s306, %s292, 128, 64, 4
        $region40: #{tpu_custom_call.1} parent=35 // pred_fallthru
          _
        // Predicated region
        $region41: #{tpu_custom_call.1} parent=35 // pred_check
          %p312 = pneg %p144
        $region42: #{tpu_custom_call.1} parent=35 // pred_check_branch
          %314 = sbr.rel (%p312) target = $region44
        $region43: #{tpu_custom_call.1} parent=35 // pred_region
          %s315 = sand.u32 %s16, 1
          %s316 = scalar_lea.sflag [#allocation3], %s315
          %s317 = sand.u32 %s134, 1
          %s318 = smul.addr %s317, 64
          %s319 = scalar_lea.vmem [#allocation8], %s318
          %s320 = smul.u32 16, %s24
          %322 = vsyncadd %s316, 0
          %s323 = smul.addr %s320, 4
          %s324 = scalar_lea.hbm %s4, %s323
          %s325 = sshll.u32 %s324, 4
          %s326 = int_to_ptr.hbm [resolvable:$true] %s325
          %s327 = sshll.u32 %s319, 4
          %s328 = int_to_ptr.vmem [resolvable:$true] %s327
          %333 = dma.hbm_to_vmem [thread:$0]  %s326, 1024, %s328, %s316, 64, 64, 4
        $region44: #{tpu_custom_call.1} parent=35 // pred_fallthru
          _
      $region36: #{tpu_custom_call.1} parent=5 // pred_fallthru
        _
      %p334 = scmp.le.s32.totalorder 1, %s16
      %p335 = scmp.lt.s32.totalorder %s16, 3
      %p336 = pnand %p334, %p335
      %p337 = pneg %p336
      // Predicated region
      $region45: #{tpu_custom_call.1} parent=5 // pred_check
        _
      $region46: #{tpu_custom_call.1} parent=5 // pred_check_branch
        %339 = sbr.rel (%p336) target = $region48
      $region47: #{tpu_custom_call.1} parent=5 // pred_region
        %s340 = ssub.s32 %s16, 1
        // Predicated region
        $region49: #{tpu_custom_call.1} parent=47 // pred_check
          %p341 = pneg %p54
        $region50: #{tpu_custom_call.1} parent=47 // pred_check_branch
          %343 = sbr.rel (%p341) target = $region52
        $region51: #{tpu_custom_call.1} parent=47 // pred_region
          %345 = dma.done [#allocation3], 1024
        $region52: #{tpu_custom_call.1} parent=47 // pred_fallthru
          _
        // Predicated region
        $region53: #{tpu_custom_call.1} parent=47 // pred_check
          %p346 = pneg %p75
        $region54: #{tpu_custom_call.1} parent=47 // pred_check_branch
          %348 = sbr.rel (%p346) target = $region56
        $region55: #{tpu_custom_call.1} parent=47 // pred_region
          %350 = dma.done [#allocation6], 1024
        $region56: #{tpu_custom_call.1} parent=47 // pred_fallthru
          _
        %s351 = sand.u32 %s21, 1
        %s352 = scalar_lea.sflag [#allocation3], %s351
        %s353 = sand.u32 %s111, 1
        %s354 = smul.addr %s353, 64
        %s355 = scalar_lea.vmem [#allocation7], %s354
        // Predicated region
        $region57: #{tpu_custom_call.1} parent=47 // pred_check
          %p356 = pneg %p124
        $region58: #{tpu_custom_call.1} parent=47 // pred_check_branch
          %358 = sbr.rel (%p356) target = $region60
        $region59: #{tpu_custom_call.1} parent=47 // pred_region
          %360 = dma.done %s352, 1024
        $region60: #{tpu_custom_call.1} parent=47 // pred_fallthru
          _
        %s361 = sand.u32 %s21, 1
        %s362 = scalar_lea.sflag [#allocation3], %s361
        %s363 = sand.u32 %s137, 1
        %s364 = smul.addr %s363, 64
        %s365 = scalar_lea.vmem [#allocation8], %s364
        // Predicated region
        $region61: #{tpu_custom_call.1} parent=47 // pred_check
          %p366 = pneg %p150
        $region62: #{tpu_custom_call.1} parent=47 // pred_check_branch
          %368 = sbr.rel (%p366) target = $region64
        $region63: #{tpu_custom_call.1} parent=47 // pred_region
          %370 = dma.done %s362, 1024
        $region64: #{tpu_custom_call.1} parent=47 // pred_fallthru
          _
        // Predicated region
        $region65: #{tpu_custom_call.1} parent=47 // pred_check
          %p371 = pneg %p171
        $region66: #{tpu_custom_call.1} parent=47 // pred_check_branch
          %373 = sbr.rel (%p371) target = $region68
        $region67: #{tpu_custom_call.1} parent=47 // pred_region
          %375 = dma.done [#allocation6], 1024
        $region68: #{tpu_custom_call.1} parent=47 // pred_fallthru
          _
        %p376 = pneg %p54
        %p377 = pneg %p51
        %p378 = pneg %p75
        %p379 = pneg %p72
        %p380 = pneg %p96
        %p381 = pneg %p93
        %s382 = sand.u32 %s21, 1
        %s383 = scalar_lea.sflag [#allocation3], %s382
        %s384 = sand.u32 %s111, 1
        %s385 = smul.addr %s384, 64
        %s386 = scalar_lea.vmem [#allocation7], %s385
        %p387 = pneg %p124
        %p388 = pneg %p121
        %s389 = sand.u32 %s21, 1
        %s390 = scalar_lea.sflag [#allocation3], %s389
        %s391 = sand.u32 %s137, 1
        %s392 = smul.addr %s391, 64
        %s393 = scalar_lea.vmem [#allocation8], %s392
        %p394 = pneg %p150
        %p395 = pneg %p147
        %p396 = pneg %p171
        %p397 = pneg %p168
        %p398 = pneg %p192
        %p399 = pneg %p189
        %p400 = pneg %p218
        %p401 = pneg %p215
        %s402 = smul.u32 16, %s25
        %s403 = smul.u32 16, %s25
        %s404 = smul.u32 16, %s26
        %s405 = smul.u32 16, %s25
        %p406 = scmp.eq.s32.totalorder %s26, 0
        // Predicated region
        $region69: #{tpu_custom_call.1} parent=47 // pred_check
          %p407 = pneg %p406
        $region70: #{tpu_custom_call.1} parent=47 // pred_check_branch
          %409 = sbr.rel (%p407) target = $region72
        $region71: #{tpu_custom_call.1} parent=47 // pred_region
          %v410 = vld [vmem:[#allocation2] sm:$0xf]
          %v411 = vld [vmem:[#allocation2 + $0x4] sm:$0xf]
          %v412 = vld [vmem:[#allocation2 + $0x8] sm:$0xf]
          %v413 = vld [vmem:[#allocation2 + $0xc] sm:$0xf]
          %v414 = vld [vmem:[#allocation2 + $0x10] sm:$0xf]
          %v415 = vld [vmem:[#allocation2 + $0x14] sm:$0xf]
          %v416 = vld [vmem:[#allocation2 + $0x18] sm:$0xf]
          %v417 = vld [vmem:[#allocation2 + $0x1c] sm:$0xf]
          %v418 = vld [vmem:[#allocation2 + $0x20] sm:$0xf]
          %v419 = vld [vmem:[#allocation2 + $0x24] sm:$0xf]
          %v420 = vld [vmem:[#allocation2 + $0x28] sm:$0xf]
          %v421 = vld [vmem:[#allocation2 + $0x2c] sm:$0xf]
          %v422 = vld [vmem:[#allocation2 + $0x30] sm:$0xf]
          %v423 = vld [vmem:[#allocation2 + $0x34] sm:$0xf]
          %v424 = vld [vmem:[#allocation2 + $0x38] sm:$0xf]
          %v425 = vld [vmem:[#allocation2 + $0x3c] sm:$0xf]
          %v426 = vld [vmem:[#allocation5] sm:$0xf]
          %v427 = vld [vmem:[#allocation5 + $0x4] sm:$0xf]
          %v428 = vld [vmem:[#allocation5 + $0x8] sm:$0xf]
          %v429 = vld [vmem:[#allocation5 + $0xc] sm:$0xf]
          %v430 = vld [vmem:[#allocation5 + $0x10] sm:$0xf]
          %v431 = vld [vmem:[#allocation5 + $0x14] sm:$0xf]
          %v432 = vld [vmem:[#allocation5 + $0x18] sm:$0xf]
          %v433 = vld [vmem:[#allocation5 + $0x1c] sm:$0xf]
          %v434 = vld [vmem:[#allocation5 + $0x20] sm:$0xf]
          %v435 = vld [vmem:[#allocation5 + $0x24] sm:$0xf]
          %v436 = vld [vmem:[#allocation5 + $0x28] sm:$0xf]
          %v437 = vld [vmem:[#allocation5 + $0x2c] sm:$0xf]
          %v438 = vld [vmem:[#allocation5 + $0x30] sm:$0xf]
          %v439 = vld [vmem:[#allocation5 + $0x34] sm:$0xf]
          %v440 = vld [vmem:[#allocation5 + $0x38] sm:$0xf]
          %v441 = vld [vmem:[#allocation5 + $0x3c] sm:$0xf]
          %v442 = vld [vmem:[%s2] sm:$0x1]
          %v444 = vperm.slane %v442, 0
          %v462 = vunpack.c.l.b16 %v410
          %v463 = vunpack.c.l.b16 %v411
          %v464 = vunpack.c.l.b16 %v412
          %v465 = vunpack.c.l.b16 %v413
          %v466 = vunpack.c.l.b16 %v414
          %v467 = vunpack.c.l.b16 %v415
          %v468 = vunpack.c.l.b16 %v416
          %v469 = vunpack.c.l.b16 %v417
          %v470 = vunpack.c.l.b16 %v418
          %v471 = vunpack.c.l.b16 %v419
          %v472 = vunpack.c.l.b16 %v420
          %v473 = vunpack.c.l.b16 %v421
          %v474 = vunpack.c.l.b16 %v422
          %v475 = vunpack.c.l.b16 %v423
          %v476 = vunpack.c.l.b16 %v424
          %v477 = vunpack.c.l.b16 %v425
          %v478 = vpack.c.b16 %v463, %v462
          %v479 = vpack.c.b16 %v465, %v464
          %v480 = vpack.c.b16 %v467, %v466
          %v481 = vpack.c.b16 %v469, %v468
          %v482 = vpack.c.b16 %v471, %v470
          %v483 = vpack.c.b16 %v473, %v472
          %v484 = vpack.c.b16 %v475, %v474
          %v485 = vpack.c.b16 %v477, %v476
          %v510 = vunpack.c.l.b16 %v426
          %v511 = vunpack.c.l.b16 %v427
          %v512 = vunpack.c.l.b16 %v428
          %v513 = vunpack.c.l.b16 %v429
          %v514 = vunpack.c.l.b16 %v430
          %v515 = vunpack.c.l.b16 %v431
          %v516 = vunpack.c.l.b16 %v432
          %v517 = vunpack.c.l.b16 %v433
          %v518 = vunpack.c.l.b16 %v434
          %v519 = vunpack.c.l.b16 %v435
          %v520 = vunpack.c.l.b16 %v436
          %v521 = vunpack.c.l.b16 %v437
          %v522 = vunpack.c.l.b16 %v438
          %v523 = vunpack.c.l.b16 %v439
          %v524 = vunpack.c.l.b16 %v440
          %v525 = vunpack.c.l.b16 %v441
          %v526 = vpack.c.b16 %v511, %v510
          %v527 = vpack.c.b16 %v513, %v512
          %v528 = vpack.c.b16 %v515, %v514
          %v529 = vpack.c.b16 %v517, %v516
          %v530 = vpack.c.b16 %v519, %v518
          %v531 = vpack.c.b16 %v521, %v520
          %v532 = vpack.c.b16 %v523, %v522
          %v533 = vpack.c.b16 %v525, %v524
          %542 = vmatpush.bf16.msra.mxu0 %v533
          %543 = vmatpush.bf16.msra.mxu0 %v532
          %544 = vmatpush.bf16.msra.mxu0 %v531
          %545 = vmatpush.bf16.msra.mxu0 %v530
          %546 = vmatpush.bf16.msra.mxu0 %v529
          %547 = vmatpush.bf16.msra.mxu0 %v528
          %548 = vmatpush.bf16.msra.mxu0 %v527
          %549 = vmatpush.bf16.msra.mxu0 %v526
          %550 = vmatmul.bf16.gmra.mxu0 %v478
          %v551 = vpop.f32.mrf.mxu0
          %v552 = vadd.f32 %v444, %v551
          %v553 = vpop.f32.mrf.mxu0
          %v554 = vadd.f32 %v444, %v553
          %555 = vmatmul.bf16.gmra.mxu0 %v479
          %v556 = vpop.f32.mrf.mxu0
          %v557 = vadd.f32 %v444, %v556
          %v558 = vpop.f32.mrf.mxu0
          %v559 = vadd.f32 %v444, %v558
          %560 = vmatmul.bf16.gmra.mxu0 %v480
          %v561 = vpop.f32.mrf.mxu0
          %v562 = vadd.f32 %v444, %v561
          %v563 = vpop.f32.mrf.mxu0
          %v564 = vadd.f32 %v444, %v563
          %565 = vmatmul.bf16.gmra.mxu0 %v481
          %v566 = vpop.f32.mrf.mxu0
          %v567 = vadd.f32 %v444, %v566
          %v568 = vpop.f32.mrf.mxu0
          %v569 = vadd.f32 %v444, %v568
          %570 = vmatmul.bf16.gmra.mxu0 %v482
          %v571 = vpop.f32.mrf.mxu0
          %v572 = vadd.f32 %v444, %v571
          %v573 = vpop.f32.mrf.mxu0
          %v574 = vadd.f32 %v444, %v573
          %575 = vmatmul.bf16.gmra.mxu0 %v483
          %v576 = vpop.f32.mrf.mxu0
          %v577 = vadd.f32 %v444, %v576
          %v578 = vpop.f32.mrf.mxu0
          %v579 = vadd.f32 %v444, %v578
          %580 = vmatmul.bf16.gmra.mxu0 %v484
          %v581 = vpop.f32.mrf.mxu0
          %v582 = vadd.f32 %v444, %v581
          %v583 = vpop.f32.mrf.mxu0
          %v584 = vadd.f32 %v444, %v583
          %585 = vmatmul.bf16.gmra.mxu0 %v485
          %v586 = vpop.f32.mrf.mxu0
          %v587 = vadd.f32 %v444, %v586
          %v588 = vpop.f32.mrf.mxu0
          %v589 = vadd.f32 %v444, %v588
          %590 = vdwg.mxu0
          %591 = vst [vmem:[#allocation10] sm:$0xff] %v552
          %592 = vst [vmem:[#allocation10 + $0x8] sm:$0xff] %v554
          %593 = vst [vmem:[#allocation10 + $0x10] sm:$0xff] %v557
          %594 = vst [vmem:[#allocation10 + $0x18] sm:$0xff] %v559
          %595 = vst [vmem:[#allocation10 + $0x20] sm:$0xff] %v562
          %596 = vst [vmem:[#allocation10 + $0x28] sm:$0xff] %v564
          %597 = vst [vmem:[#allocation10 + $0x30] sm:$0xff] %v567
          %598 = vst [vmem:[#allocation10 + $0x38] sm:$0xff] %v569
          %599 = vst [vmem:[#allocation10 + $0x40] sm:$0xff] %v572
          %600 = vst [vmem:[#allocation10 + $0x48] sm:$0xff] %v574
          %601 = vst [vmem:[#allocation10 + $0x50] sm:$0xff] %v577
          %602 = vst [vmem:[#allocation10 + $0x58] sm:$0xff] %v579
          %603 = vst [vmem:[#allocation10 + $0x60] sm:$0xff] %v582
          %604 = vst [vmem:[#allocation10 + $0x68] sm:$0xff] %v584
          %605 = vst [vmem:[#allocation10 + $0x70] sm:$0xff] %v587
          %606 = vst [vmem:[#allocation10 + $0x78] sm:$0xff] %v589
        $region72: #{tpu_custom_call.1} parent=47 // pred_fallthru
          _
        %v607 = vld [vmem:[%s365] sm:$0xf]
        %v608 = vld [vmem:[%s365 + $0x4] sm:$0xf]
        %v609 = vld [vmem:[%s365 + $0x8] sm:$0xf]
        %v610 = vld [vmem:[%s365 + $0xc] sm:$0xf]
        %v611 = vld [vmem:[%s365 + $0x10] sm:$0xf]
        %v612 = vld [vmem:[%s365 + $0x14] sm:$0xf]
        %v613 = vld [vmem:[%s365 + $0x18] sm:$0xf]
        %v614 = vld [vmem:[%s365 + $0x1c] sm:$0xf]
        %v615 = vld [vmem:[%s365 + $0x20] sm:$0xf]
        %v616 = vld [vmem:[%s365 + $0x24] sm:$0xf]
        %v617 = vld [vmem:[%s365 + $0x28] sm:$0xf]
        %v618 = vld [vmem:[%s365 + $0x2c] sm:$0xf]
        %v619 = vld [vmem:[%s365 + $0x30] sm:$0xf]
        %v620 = vld [vmem:[%s365 + $0x34] sm:$0xf]
        %v621 = vld [vmem:[%s365 + $0x38] sm:$0xf]
        %v622 = vld [vmem:[%s365 + $0x3c] sm:$0xf]
        %v623 = vld [vmem:[#allocation9] sm:$0xf]
        %v624 = vld [vmem:[#allocation9 + $0x4] sm:$0xf]
        %v625 = vld [vmem:[#allocation9 + $0x8] sm:$0xf]
        %v626 = vld [vmem:[#allocation9 + $0xc] sm:$0xf]
        %v627 = vld [vmem:[#allocation9 + $0x10] sm:$0xf]
        %v628 = vld [vmem:[#allocation9 + $0x14] sm:$0xf]
        %v629 = vld [vmem:[#allocation9 + $0x18] sm:$0xf]
        %v630 = vld [vmem:[#allocation9 + $0x1c] sm:$0xf]
        %v631 = vld [vmem:[#allocation9 + $0x20] sm:$0xf]
        %v632 = vld [vmem:[#allocation9 + $0x24] sm:$0xf]
        %v633 = vld [vmem:[#allocation9 + $0x28] sm:$0xf]
        %v634 = vld [vmem:[#allocation9 + $0x2c] sm:$0xf]
        %v635 = vld [vmem:[#allocation9 + $0x30] sm:$0xf]
        %v636 = vld [vmem:[#allocation9 + $0x34] sm:$0xf]
        %v637 = vld [vmem:[#allocation9 + $0x38] sm:$0xf]
        %v638 = vld [vmem:[#allocation9 + $0x3c] sm:$0xf]
        %v639 = vld [vmem:[%s6] sm:$0x1]
        %v641 = vperm.slane %v639, 0
        %v659 = vunpack.c.l.b16 %v607
        %v660 = vunpack.c.l.b16 %v608
        %v661 = vunpack.c.l.b16 %v609
        %v662 = vunpack.c.l.b16 %v610
        %v663 = vunpack.c.l.b16 %v611
        %v664 = vunpack.c.l.b16 %v612
        %v665 = vunpack.c.l.b16 %v613
        %v666 = vunpack.c.l.b16 %v614
        %v667 = vunpack.c.l.b16 %v615
        %v668 = vunpack.c.l.b16 %v616
        %v669 = vunpack.c.l.b16 %v617
        %v670 = vunpack.c.l.b16 %v618
        %v671 = vunpack.c.l.b16 %v619
        %v672 = vunpack.c.l.b16 %v620
        %v673 = vunpack.c.l.b16 %v621
        %v674 = vunpack.c.l.b16 %v622
        %v675 = vpack.c.b16 %v660, %v659
        %v676 = vpack.c.b16 %v662, %v661
        %v677 = vpack.c.b16 %v664, %v663
        %v678 = vpack.c.b16 %v666, %v665
        %v679 = vpack.c.b16 %v668, %v667
        %v680 = vpack.c.b16 %v670, %v669
        %v681 = vpack.c.b16 %v672, %v671
        %v682 = vpack.c.b16 %v674, %v673
        %v707 = vunpack.c.l.b16 %v623
        %v708 = vunpack.c.l.b16 %v624
        %v709 = vunpack.c.l.b16 %v625
        %v710 = vunpack.c.l.b16 %v626
        %v711 = vunpack.c.l.b16 %v627
        %v712 = vunpack.c.l.b16 %v628
        %v713 = vunpack.c.l.b16 %v629
        %v714 = vunpack.c.l.b16 %v630
        %v715 = vunpack.c.l.b16 %v631
        %v716 = vunpack.c.l.b16 %v632
        %v717 = vunpack.c.l.b16 %v633
        %v718 = vunpack.c.l.b16 %v634
        %v719 = vunpack.c.l.b16 %v635
        %v720 = vunpack.c.l.b16 %v636
        %v721 = vunpack.c.l.b16 %v637
        %v722 = vunpack.c.l.b16 %v638
        %v723 = vpack.c.b16 %v708, %v707
        %v724 = vpack.c.b16 %v710, %v709
        %v725 = vpack.c.b16 %v712, %v711
        %v726 = vpack.c.b16 %v714, %v713
        %v727 = vpack.c.b16 %v716, %v715
        %v728 = vpack.c.b16 %v718, %v717
        %v729 = vpack.c.b16 %v720, %v719
        %v730 = vpack.c.b16 %v722, %v721
        %739 = vmatpush.bf16.msra.mxu0 %v730
        %740 = vmatpush.bf16.msra.mxu0 %v729
        %741 = vmatpush.bf16.msra.mxu0 %v728
        %742 = vmatpush.bf16.msra.mxu0 %v727
        %743 = vmatpush.bf16.msra.mxu0 %v726
        %744 = vmatpush.bf16.msra.mxu0 %v725
        %745 = vmatpush.bf16.msra.mxu0 %v724
        %746 = vmatpush.bf16.msra.mxu0 %v723
        %747 = vmatmul.bf16.gmra.mxu0 %v675
        %v748 = vpop.f32.mrf.mxu0
        %v749 = vadd.f32 %v641, %v748
        %v750 = vpop.f32.mrf.mxu0
        %v751 = vadd.f32 %v641, %v750
        %752 = vmatmul.bf16.gmra.mxu0 %v676
        %v753 = vpop.f32.mrf.mxu0
        %v754 = vadd.f32 %v641, %v753
        %v755 = vpop.f32.mrf.mxu0
        %v756 = vadd.f32 %v641, %v755
        %757 = vmatmul.bf16.gmra.mxu0 %v677
        %v758 = vpop.f32.mrf.mxu0
        %v759 = vadd.f32 %v641, %v758
        %v760 = vpop.f32.mrf.mxu0
        %v761 = vadd.f32 %v641, %v760
        %762 = vmatmul.bf16.gmra.mxu0 %v678
        %v763 = vpop.f32.mrf.mxu0
        %v764 = vadd.f32 %v641, %v763
        %v765 = vpop.f32.mrf.mxu0
        %v766 = vadd.f32 %v641, %v765
        %767 = vmatmul.bf16.gmra.mxu0 %v679
        %v768 = vpop.f32.mrf.mxu0
        %v769 = vadd.f32 %v641, %v768
        %v770 = vpop.f32.mrf.mxu0
        %v771 = vadd.f32 %v641, %v770
        %772 = vmatmul.bf16.gmra.mxu0 %v680
        %v773 = vpop.f32.mrf.mxu0
        %v774 = vadd.f32 %v641, %v773
        %v775 = vpop.f32.mrf.mxu0
        %v776 = vadd.f32 %v641, %v775
        %777 = vmatmul.bf16.gmra.mxu0 %v681
        %v778 = vpop.f32.mrf.mxu0
        %v779 = vadd.f32 %v641, %v778
        %v780 = vpop.f32.mrf.mxu0
        %v781 = vadd.f32 %v641, %v780
        %782 = vmatmul.bf16.gmra.mxu0 %v682
        %v783 = vpop.f32.mrf.mxu0
        %v784 = vadd.f32 %v641, %v783
        %v785 = vpop.f32.mrf.mxu0
        %v786 = vadd.f32 %v641, %v785
        %787 = vdwg.mxu0
        %v788 = vld [vmem:[#allocation10] sm:$0xff]
        %v789 = vld [vmem:[#allocation10 + $0x8] sm:$0xff]
        %v790 = vld [vmem:[#allocation10 + $0x10] sm:$0xff]
        %v791 = vld [vmem:[#allocation10 + $0x18] sm:$0xff]
        %v792 = vld [vmem:[#allocation10 + $0x20] sm:$0xff]
        %v793 = vld [vmem:[#allocation10 + $0x28] sm:$0xff]
        %v794 = vld [vmem:[#allocation10 + $0x30] sm:$0xff]
        %v795 = vld [vmem:[#allocation10 + $0x38] sm:$0xff]
        %v796 = vld [vmem:[#allocation10 + $0x40] sm:$0xff]
        %v797 = vld [vmem:[#allocation10 + $0x48] sm:$0xff]
        %v798 = vld [vmem:[#allocation10 + $0x50] sm:$0xff]
        %v799 = vld [vmem:[#allocation10 + $0x58] sm:$0xff]
        %v800 = vld [vmem:[#allocation10 + $0x60] sm:$0xff]
        %v801 = vld [vmem:[#allocation10 + $0x68] sm:$0xff]
        %v802 = vld [vmem:[#allocation10 + $0x70] sm:$0xff]
        %v803 = vld [vmem:[#allocation10 + $0x78] sm:$0xff]
        %v804 = vld [vmem:[%s355] sm:$0xf]
        %v805 = vld [vmem:[%s355 + $0x4] sm:$0xf]
        %v806 = vld [vmem:[%s355 + $0x8] sm:$0xf]
        %v807 = vld [vmem:[%s355 + $0xc] sm:$0xf]
        %v808 = vld [vmem:[%s355 + $0x10] sm:$0xf]
        %v809 = vld [vmem:[%s355 + $0x14] sm:$0xf]
        %v810 = vld [vmem:[%s355 + $0x18] sm:$0xf]
        %v811 = vld [vmem:[%s355 + $0x1c] sm:$0xf]
        %v812 = vld [vmem:[%s355 + $0x20] sm:$0xf]
        %v813 = vld [vmem:[%s355 + $0x24] sm:$0xf]
        %v814 = vld [vmem:[%s355 + $0x28] sm:$0xf]
        %v815 = vld [vmem:[%s355 + $0x2c] sm:$0xf]
        %v816 = vld [vmem:[%s355 + $0x30] sm:$0xf]
        %v817 = vld [vmem:[%s355 + $0x34] sm:$0xf]
        %v818 = vld [vmem:[%s355 + $0x38] sm:$0xf]
        %v819 = vld [vmem:[%s355 + $0x3c] sm:$0xf]
        %v820 = vpack.c.bf16 %v751, %v749
        %v821 = vpack.c.bf16 %v756, %v754
        %v822 = vpack.c.bf16 %v761, %v759
        %v823 = vpack.c.bf16 %v766, %v764
        %v824 = vpack.c.bf16 %v771, %v769
        %v825 = vpack.c.bf16 %v776, %v774
        %v826 = vpack.c.bf16 %v781, %v779
        %v827 = vpack.c.bf16 %v786, %v784
        %v844 = vunpack.c.l.b16 %v804
        %v845 = vunpack.c.l.b16 %v805
        %v846 = vunpack.c.l.b16 %v806
        %v847 = vunpack.c.l.b16 %v807
        %v848 = vunpack.c.l.b16 %v808
        %v849 = vunpack.c.l.b16 %v809
        %v850 = vunpack.c.l.b16 %v810
        %v851 = vunpack.c.l.b16 %v811
        %v852 = vunpack.c.l.b16 %v812
        %v853 = vunpack.c.l.b16 %v813
        %v854 = vunpack.c.l.b16 %v814
        %v855 = vunpack.c.l.b16 %v815
        %v856 = vunpack.c.l.b16 %v816
        %v857 = vunpack.c.l.b16 %v817
        %v858 = vunpack.c.l.b16 %v818
        %v859 = vunpack.c.l.b16 %v819
        %v860 = vpack.c.b16 %v845, %v844
        %v861 = vpack.c.b16 %v847, %v846
        %v862 = vpack.c.b16 %v849, %v848
        %v863 = vpack.c.b16 %v851, %v850
        %v864 = vpack.c.b16 %v853, %v852
        %v865 = vpack.c.b16 %v855, %v854
        %v866 = vpack.c.b16 %v857, %v856
        %v867 = vpack.c.b16 %v859, %v858
        %876 = vmatpush.bf16.msra.mxu0 %v827
        %877 = vmatpush.bf16.msra.mxu0 %v826
        %878 = vmatpush.bf16.msra.mxu0 %v825
        %879 = vmatpush.bf16.msra.mxu0 %v824
        %880 = vmatpush.bf16.msra.mxu0 %v823
        %881 = vmatpush.bf16.msra.mxu0 %v822
        %882 = vmatpush.bf16.msra.mxu0 %v821
        %883 = vmatpush.bf16.msra.mxu0 %v820
        %884 = vmatmul.bf16.gmra.mxu0 %v860
        %v885 = vpop.f32.mrf.mxu0
        %v886 = vadd.f32 0.0, %v885
        %v887 = vpop.f32.mrf.mxu0
        %v888 = vadd.f32 0.0, %v887
        %889 = vmatmul.bf16.gmra.mxu0 %v861
        %v890 = vpop.f32.mrf.mxu0
        %v891 = vadd.f32 0.0, %v890
        %v892 = vpop.f32.mrf.mxu0
        %v893 = vadd.f32 0.0, %v892
        %894 = vmatmul.bf16.gmra.mxu0 %v862
        %v895 = vpop.f32.mrf.mxu0
        %v896 = vadd.f32 0.0, %v895
        %v897 = vpop.f32.mrf.mxu0
        %v898 = vadd.f32 0.0, %v897
        %899 = vmatmul.bf16.gmra.mxu0 %v863
        %v900 = vpop.f32.mrf.mxu0
        %v901 = vadd.f32 0.0, %v900
        %v902 = vpop.f32.mrf.mxu0
        %v903 = vadd.f32 0.0, %v902
        %904 = vmatmul.bf16.gmra.mxu0 %v864
        %v905 = vpop.f32.mrf.mxu0
        %v906 = vadd.f32 0.0, %v905
        %v907 = vpop.f32.mrf.mxu0
        %v908 = vadd.f32 0.0, %v907
        %909 = vmatmul.bf16.gmra.mxu0 %v865
        %v910 = vpop.f32.mrf.mxu0
        %v911 = vadd.f32 0.0, %v910
        %v912 = vpop.f32.mrf.mxu0
        %v913 = vadd.f32 0.0, %v912
        %914 = vmatmul.bf16.gmra.mxu0 %v866
        %v915 = vpop.f32.mrf.mxu0
        %v916 = vadd.f32 0.0, %v915
        %v917 = vpop.f32.mrf.mxu0
        %v918 = vadd.f32 0.0, %v917
        %919 = vmatmul.bf16.gmra.mxu0 %v867
        %v920 = vpop.f32.mrf.mxu0
        %v921 = vadd.f32 0.0, %v920
        %v922 = vpop.f32.mrf.mxu0
        %v923 = vadd.f32 0.0, %v922
        %924 = vdwg.mxu0
        %v925 = vadd.f32 %v788, %v886
        %v926 = vadd.f32 %v789, %v888
        %v927 = vadd.f32 %v790, %v891
        %v928 = vadd.f32 %v791, %v893
        %v929 = vadd.f32 %v792, %v896
        %v930 = vadd.f32 %v793, %v898
        %v931 = vadd.f32 %v794, %v901
        %v932 = vadd.f32 %v795, %v903
        %v933 = vadd.f32 %v796, %v906
        %v934 = vadd.f32 %v797, %v908
        %v935 = vadd.f32 %v798, %v911
        %v936 = vadd.f32 %v799, %v913
        %v937 = vadd.f32 %v800, %v916
        %v938 = vadd.f32 %v801, %v918
        %v939 = vadd.f32 %v802, %v921
        %v940 = vadd.f32 %v803, %v923
        %941 = vst [vmem:[#allocation10] sm:$0xff] %v925
        %942 = vst [vmem:[#allocation10 + $0x8] sm:$0xff] %v926
        %943 = vst [vmem:[#allocation10 + $0x10] sm:$0xff] %v927
        %944 = vst [vmem:[#allocation10 + $0x18] sm:$0xff] %v928
        %945 = vst [vmem:[#allocation10 + $0x20] sm:$0xff] %v929
        %946 = vst [vmem:[#allocation10 + $0x28] sm:$0xff] %v930
        %947 = vst [vmem:[#allocation10 + $0x30] sm:$0xff] %v931
        %948 = vst [vmem:[#allocation10 + $0x38] sm:$0xff] %v932
        %949 = vst [vmem:[#allocation10 + $0x40] sm:$0xff] %v933
        %950 = vst [vmem:[#allocation10 + $0x48] sm:$0xff] %v934
        %951 = vst [vmem:[#allocation10 + $0x50] sm:$0xff] %v935
        %952 = vst [vmem:[#allocation10 + $0x58] sm:$0xff] %v936
        %953 = vst [vmem:[#allocation10 + $0x60] sm:$0xff] %v937
        %954 = vst [vmem:[#allocation10 + $0x68] sm:$0xff] %v938
        %955 = vst [vmem:[#allocation10 + $0x70] sm:$0xff] %v939
        %956 = vst [vmem:[#allocation10 + $0x78] sm:$0xff] %v940
        %p957 = scmp.eq.s32.totalorder %s26, 1
        // Predicated region
        $region73: #{tpu_custom_call.1} parent=47 // pred_check
          %p958 = pneg %p957
        $region74: #{tpu_custom_call.1} parent=47 // pred_check_branch
          %960 = sbr.rel (%p958) target = $region76
        $region75: #{tpu_custom_call.1} parent=47 // pred_region
          %v961 = vld [vmem:[#allocation10] sm:$0xff]
          %v962 = vld [vmem:[#allocation10 + $0x8] sm:$0xff]
          %v963 = vld [vmem:[#allocation10 + $0x10] sm:$0xff]
          %v964 = vld [vmem:[#allocation10 + $0x18] sm:$0xff]
          %v965 = vld [vmem:[#allocation10 + $0x20] sm:$0xff]
          %v966 = vld [vmem:[#allocation10 + $0x28] sm:$0xff]
          %v967 = vld [vmem:[#allocation10 + $0x30] sm:$0xff]
          %v968 = vld [vmem:[#allocation10 + $0x38] sm:$0xff]
          %v969 = vld [vmem:[#allocation10 + $0x40] sm:$0xff]
          %v970 = vld [vmem:[#allocation10 + $0x48] sm:$0xff]
          %v971 = vld [vmem:[#allocation10 + $0x50] sm:$0xff]
          %v972 = vld [vmem:[#allocation10 + $0x58] sm:$0xff]
          %v973 = vld [vmem:[#allocation10 + $0x60] sm:$0xff]
          %v974 = vld [vmem:[#allocation10 + $0x68] sm:$0xff]
          %v975 = vld [vmem:[#allocation10 + $0x70] sm:$0xff]
          %v976 = vld [vmem:[#allocation10 + $0x78] sm:$0xff]
          %v977 = vmax.f32 %v961, 0.0
          %v978 = vmax.f32 %v962, 0.0
          %v979 = vmax.f32 %v963, 0.0
          %v980 = vmax.f32 %v964, 0.0
          %v981 = vmax.f32 %v965, 0.0
          %v982 = vmax.f32 %v966, 0.0
          %v983 = vmax.f32 %v967, 0.0
          %v984 = vmax.f32 %v968, 0.0
          %v985 = vmax.f32 %v969, 0.0
          %v986 = vmax.f32 %v970, 0.0
          %v987 = vmax.f32 %v971, 0.0
          %v988 = vmax.f32 %v972, 0.0
          %v989 = vmax.f32 %v973, 0.0
          %v990 = vmax.f32 %v974, 0.0
          %v991 = vmax.f32 %v975, 0.0
          %v992 = vmax.f32 %v976, 0.0
          %993 = vst [vmem:[#allocation10] sm:$0xff] %v977
          %994 = vst [vmem:[#allocation10 + $0x8] sm:$0xff] %v978
          %995 = vst [vmem:[#allocation10 + $0x10] sm:$0xff] %v979
          %996 = vst [vmem:[#allocation10 + $0x18] sm:$0xff] %v980
          %997 = vst [vmem:[#allocation10 + $0x20] sm:$0xff] %v981
          %998 = vst [vmem:[#allocation10 + $0x28] sm:$0xff] %v982
          %999 = vst [vmem:[#allocation10 + $0x30] sm:$0xff] %v983
          %1000 = vst [vmem:[#allocation10 + $0x38] sm:$0xff] %v984
          %1001 = vst [vmem:[#allocation10 + $0x40] sm:$0xff] %v985
          %1002 = vst [vmem:[#allocation10 + $0x48] sm:$0xff] %v986
          %1003 = vst [vmem:[#allocation10 + $0x50] sm:$0xff] %v987
          %1004 = vst [vmem:[#allocation10 + $0x58] sm:$0xff] %v988
          %1005 = vst [vmem:[#allocation10 + $0x60] sm:$0xff] %v989
          %1006 = vst [vmem:[#allocation10 + $0x68] sm:$0xff] %v990
          %1007 = vst [vmem:[#allocation10 + $0x70] sm:$0xff] %v991
          %1008 = vst [vmem:[#allocation10 + $0x78] sm:$0xff] %v992
        $region76: #{tpu_custom_call.1} parent=47 // pred_fallthru
          _
        // Predicated region
        $region77: #{tpu_custom_call.1} parent=47 // pred_check
          %p1009 = pneg %p215
        $region78: #{tpu_custom_call.1} parent=47 // pred_check_branch
          %1011 = sbr.rel (%p1009) target = $region80
        $region79: #{tpu_custom_call.1} parent=47 // pred_region
          %s1012 = smul.u32 16, %s25
          %1014 = vsyncadd [#allocation4], 0
          %s1015 = smul.addr %s1012, 8
          %s1016 = scalar_lea.hbm %s7, %s1015
          %s1017 = sshll.u32 [#allocation10], 4
          %s1018 = int_to_ptr.vmem [resolvable:$true] %s1017
          %s1019 = sshll.u32 %s1016, 4
          %s1020 = int_to_ptr.hbm [resolvable:$true] %s1019
          %1025 = dma.vmem_to_hbm [thread:$0]  %s1018, 2048, %s1020, [#allocation4], 128, 128, 8
        $region80: #{tpu_custom_call.1} parent=47 // pred_fallthru
          _
        // Predicated region
        $region81: #{tpu_custom_call.1} parent=47 // pred_check
          %p1026 = pneg %p215
        $region82: #{tpu_custom_call.1} parent=47 // pred_check_branch
          %1028 = sbr.rel (%p1026) target = $region84
        $region83: #{tpu_custom_call.1} parent=47 // pred_region
          %1030 = dma.done [#allocation4], 2048
        $region84: #{tpu_custom_call.1} parent=47 // pred_fallthru
          _
      $region48: #{tpu_custom_call.1} parent=5 // pred_fallthru
        _
      %p1031 = scmp.le.s32.totalorder 2, %s16
      // Predicated region
      $region85: #{tpu_custom_call.1} parent=5 // pred_check
        %p1032 = pneg %p1031
      $region86: #{tpu_custom_call.1} parent=5 // pred_check_branch
        %1034 = sbr.rel (%p1032) target = $region88
      $region87: #{tpu_custom_call.1} parent=5 // pred_region
        %s1035 = ssub.s32 %s16, 2
      $region88: #{tpu_custom_call.1} parent=5 // pred_fallthru
        _
    $region6: #{tpu_custom_call.1} parent=1 // loop_footer
      %s20 = sadd.s32 1, %s16
    $region7: #{tpu_custom_call.1} parent=1 // loop_footer_branch
      %15 = sbr.rel target = $region3
    $region8: #{tpu_custom_call.1} parent=1 // loop_exit
      _
    %1036 = vsyncpa [#allocation3], 1
    %s1037 = scalar_lea.sflag [#allocation3], 1
    %1038 = vsyncpa %s1037, 1
    %1039 = vsyncpa [#allocation6], 1
    %1040 = vsyncpa [#allocation4], 1
    %s1041 = scalar_lea.sflag [#allocation4], 1
    %1042 = vsyncpa %s1041, 1

</llo_original>
